<compile_context>
chip_gen: v6e
topology: v6e:2x2x1
jax: 0.10.0
libtpu: 0.0.40
codegen_flags: <defaults>
</compile_context>

<pallas_src>
from functools import partial

import jax
import jax.numpy as jnp
from jax.experimental import pallas as pl
from jax.experimental.pallas import tpu as pltpu

NUM_CLASSES = 14
C_PAD = 128          # class dim padded to one full lane register (lane-dense stores)
D_IMG = 512
D_TXT = 768
TB_MAX = 1024        # batch rows per grid step (multiple of 16 for bf16 sublane packing)
SMALL_BATCH_XLA = 64 # below this, skip Pallas and let XLA fuse the tiny gemm


def fusion_head_kernel(img_ref, txt_ref, w_img_ref, w_txt_ref, b_ref, out_ref):
    """out = concat(img, txt_cls) @ W_pad + b_pad  (split matmul, f32 accumulate, bf16 store)."""
    logits = jnp.dot(img_ref[...], w_img_ref[...], preferred_element_type=jnp.float32)
    logits = logits + jnp.dot(txt_ref[...], w_txt_ref[...], preferred_element_type=jnp.float32)
    out_ref[...] = (logits + b_ref[...]).astype(out_ref.dtype)   # (TB, 128) bf16 store


def prepare_fc_params(w, b):
    """One-time prep of nn.Linear(1280, 14) params.

    w: (1280, 14) stored as (in_features, out_features); b: (14,)
    Returns bf16 weights split at the image/text boundary and padded to 128
    output lanes, plus an f32 (1, 128) padded bias.
    """
    d_in = D_IMG + D_TXT
    w_pad = jnp.zeros((d_in, C_PAD), jnp.bfloat16)
    w_pad = w_pad.at[:, :NUM_CLASSES].set(w.astype(jnp.bfloat16))
    b_pad = jnp.zeros((1, C_PAD), jnp.float32)
    b_pad = b_pad.at[0, :NUM_CLASSES].set(b.astype(jnp.float32))
    return w_pad[:D_IMG], w_pad[D_IMG:], b_pad


def _pick_tb(batch):
    """Batch tile: >=2 (target 4) grid steps for v7x megacore, multiple of 16 rows."""
    if batch <= 16:
        return batch
    tb = pl.cdiv(batch, 4)                 # aim for ~4 grid steps
    tb = ((tb + 15) // 16) * 16            # bf16 packs 16 rows per sublane group
    return max(16, min(TB_MAX, tb))


@partial(jax.jit, static_argnames=("use_pallas",))
def multimodal_forward(image_features, text_hidden, w_img, w_txt, b_pad, use_pallas=None):
    """JAX wrapper mirroring MultimodalModel.forward.

    image_features: (B, 512)    -- stands in for clip_model.encode_image(images)
    text_hidden:    (B, S, 768) -- stands in for bert_model(...).last_hidden_state
    w_img/w_txt/b_pad: outputs of prepare_fc_params

    Activations are expected in bf16 (cast at the encoder output); an astype
    here is a no-op if they already are.
    """
    B, S = text_hidden.shape[0], text_hidden.shape[1]
    img = image_features.astype(jnp.bfloat16)

    if use_pallas is None:                      # B is static at trace time
        use_pallas = B > SMALL_BATCH_XLA

    if not use_pallas:
        # Tiny batches: pallas_call fixed cost dominates; let XLA fuse gemm + slice.
        txt_cls = text_hidden[:, 0, :].astype(jnp.bfloat16)
        logits = (jnp.dot(img, w_img, preferred_element_type=jnp.float32)
                  + jnp.dot(txt_cls, w_txt, preferred_element_type=jnp.float32)
                  + b_pad)
        return logits[:, :NUM_CLASSES]

    # Free (contiguous) reshape; the BlockSpec below selects columns [0:768]
    # of each row == last_hidden_state[:, 0, :] (CLS), DMA'd straight from HBM.
    text_flat = text_hidden.astype(jnp.bfloat16).reshape(B, S * D_TXT)

    TB = _pick_tb(B)
    grid = (pl.cdiv(B, TB),)

    out = pl.pallas_call(
        fusion_head_kernel,
        out_shape=jax.ShapeDtypeStruct((B, C_PAD), jnp.bfloat16),
        grid=grid,
        in_specs=[
            pl.BlockSpec((TB, D_IMG), lambda i: (i, 0)),     # image features tile (bf16)
            # CLS slice of flattened text (768 contiguous bf16 per row).  If the
            # strided DMA under-delivers for large S, add pipeline_mode=pl.Buffered(3).
            pl.BlockSpec((TB, D_TXT), lambda i: (i, 0)),
            pl.BlockSpec((D_IMG, C_PAD), lambda i: (0, 0)),  # W[:512], resident bf16
            pl.BlockSpec((D_TXT, C_PAD), lambda i: (0, 0)),  # W[512:], resident bf16
            pl.BlockSpec((1, C_PAD), lambda i: (0, 0)),      # bias, resident f32
        ],
        out_specs=pl.BlockSpec((TB, C_PAD), lambda i: (i, 0)),
        compiler_params=pltpu.CompilerParams(
            dimension_semantics=("parallel",)),
    )(img, text_flat, w_img, w_txt, b_pad)

    return out[:, :NUM_CLASSES].astype(jnp.float32)


if __name__ == "__main__":
    # TODO(synk): clip_model.encode_image / BertTokenizer / BertModel are external
    # pretrained networks; their outputs are synthesized as kernel inputs here.
    key = jax.random.PRNGKey(0)
    k_img, k_txt, k_w, k_b = jax.random.split(key, 4)

    S = 8
    B_big = 128    # exercises the Pallas path (multi-step grid)
    B_small = 4    # exercises the small-batch XLA fallback

    image_features = jax.random.normal(k_img, (B_big, D_IMG), dtype=jnp.float32)
    text_hidden = jax.random.normal(k_txt, (B_big, S, D_TXT), dtype=jnp.float32)

    # Deterministic fc params (nn.Linear(1280, 14)), stored as (in, out).
    bound = 1.0 / jnp.sqrt(float(D_IMG + D_TXT))
    w = jax.random.uniform(k_w, (D_IMG + D_TXT, NUM_CLASSES),
                           minval=-bound, maxval=bound, dtype=jnp.float32)
    b = jax.random.uniform(k_b, (NUM_CLASSES,),
                           minval=-bound, maxval=bound, dtype=jnp.float32)

    w_img, w_txt, b_pad = prepare_fc_params(w, b)   # one-time weight prep

    # Encoder outputs arrive in bf16 (the cast fuses into the encoders' last op).
    img_bf16 = image_features.astype(jnp.bfloat16)
    txt_bf16 = text_hidden.astype(jnp.bfloat16)

    # --- Pallas path (B > SMALL_BATCH_XLA) ---
    out = multimodal_forward(img_bf16, txt_bf16, w_img, w_txt, b_pad)
    out = jax.block_until_ready(out)

    # Pure-JAX f32 reference of the fused head, fed the same bf16-rounded
    # activations the kernel sees (kernel uses bf16 MXU inputs/weights,
    # f32 accumulation, bf16 output store -> loosened tolerance).
    combined = jnp.concatenate(
        [img_bf16.astype(jnp.float32), txt_bf16[:, 0, :].astype(jnp.float32)], axis=1)
    ref = combined @ w + b
    assert out.shape == (B_big, NUM_CLASSES)
    assert jnp.allclose(out, ref, atol=5e-2, rtol=5e-2), \
        float(jnp.max(jnp.abs(out - ref)))

    # --- Small-batch fallback path (B <= SMALL_BATCH_XLA) ---
    out_s = multimodal_forward(img_bf16[:B_small], txt_bf16[:B_small],
                               w_img, w_txt, b_pad)
    out_s = jax.block_until_ready(out_s)
    assert out_s.shape == (B_small, NUM_CLASSES)
    assert jnp.allclose(out_s, ref[:B_small], atol=5e-2, rtol=5e-2), \
        float(jnp.max(jnp.abs(out_s - ref[:B_small])))

    print("KERNEL_OK")
</pallas_src>

<mosaic_0001>
module attributes {stable_mosaic.version = 11 : i64} {
  func.func @fusion_head_kernel(%arg0: i32, %arg1: memref<32x512xbf16, #tpu.memory_space<vmem>>, %arg2: memref<32x768xbf16, #tpu.memory_space<vmem>>, %arg3: memref<512x128xbf16, #tpu.memory_space<vmem>>, %arg4: memref<768x128xbf16, #tpu.memory_space<vmem>>, %arg5: memref<1x128xf32, #tpu.memory_space<vmem>>, %arg6: memref<32x128xbf16, #tpu.memory_space<vmem>>) attributes {dimension_semantics = [#tpu.dimension_semantics<parallel>], iteration_bounds = array<i64: 4>, scalar_prefetch = 0 : i64, scratch_operands = 0 : i64, tpu.core_type = #tpu.core_type<tc>, window_params = [{transform_indices = @transform_0, window_bounds = array<i64: 32, 512>}, {transform_indices = @transform_1, window_bounds = array<i64: 32, 768>}, {pipeline_mode = #tpu.pipeline_mode<synchronous>, transform_indices = @transform_2, window_bounds = array<i64: 512, 128>}, {pipeline_mode = #tpu.pipeline_mode<synchronous>, transform_indices = @transform_3, window_bounds = array<i64: 768, 128>}, {pipeline_mode = #tpu.pipeline_mode<synchronous>, transform_indices = @transform_4, window_bounds = array<i64: 1, 128>}, {transform_indices = @transform_5, window_bounds = array<i64: 32, 128>}]} {
    %c0 = arith.constant 0 : index
    %c0_0 = arith.constant 0 : index
    %0 = vector.load %arg1[%c0, %c0_0] : memref<32x512xbf16, #tpu.memory_space<vmem>>, vector<32x512xbf16>
    %c0_1 = arith.constant 0 : index
    %c0_2 = arith.constant 0 : index
    %1 = vector.load %arg3[%c0_1, %c0_2] : memref<512x128xbf16, #tpu.memory_space<vmem>>, vector<512x128xbf16>
    %cst = arith.constant dense<0.000000e+00> : vector<32x128xf32>
    %2 = tpu.matmul %0, %1, %cst {dimension_numbers = #tpu.dot_dimension_numbers<[1], [0], [0], [1], [0, 0, 1, 1], [], []>} : vector<32x512xbf16>, vector<512x128xbf16>, vector<32x128xf32> -> vector<32x128xf32>
    %c0_3 = arith.constant 0 : index
    %c0_4 = arith.constant 0 : index
    %3 = vector.load %arg2[%c0_3, %c0_4] : memref<32x768xbf16, #tpu.memory_space<vmem>>, vector<32x768xbf16>
    %c0_5 = arith.constant 0 : index
    %c0_6 = arith.constant 0 : index
    %4 = vector.load %arg4[%c0_5, %c0_6] : memref<768x128xbf16, #tpu.memory_space<vmem>>, vector<768x128xbf16>
    %cst_7 = arith.constant dense<0.000000e+00> : vector<32x128xf32>
    %5 = tpu.matmul %3, %4, %cst_7 {dimension_numbers = #tpu.dot_dimension_numbers<[1], [0], [0], [1], [0, 0, 1, 1], [], []>} : vector<32x768xbf16>, vector<768x128xbf16>, vector<32x128xf32> -> vector<32x128xf32>
    %6 = arith.addf %2, %5 : vector<32x128xf32>
    %c0_8 = arith.constant 0 : index
    %c0_9 = arith.constant 0 : index
    %7 = vector.load %arg5[%c0_8, %c0_9] : memref<1x128xf32, #tpu.memory_space<vmem>>, vector<1x128xf32>
    %8 = vector.broadcast %7 : vector<1x128xf32> to vector<32x128xf32>
    %9 = arith.addf %6, %8 : vector<32x128xf32>
    %10 = arith.truncf %9 : vector<32x128xf32> to vector<32x128xbf16>
    %c0_10 = arith.constant 0 : index
    %c0_11 = arith.constant 0 : index
    %11 = vector.load %arg6[%c0_10, %c0_11] : memref<32x128xbf16, #tpu.memory_space<vmem>>, vector<32x128xbf16>
    tpu.vector_store %arg6[%c0_10, %c0_11], %10 {strides = array<i32>} : memref<32x128xbf16, #tpu.memory_space<vmem>>, vector<32x128xbf16>,
    return
  }
  func.func @transform_0(%arg0: i32) -> (i32, i32) {
    %c0_i32 = arith.constant 0 : i32
    %c0_i32_0 = arith.constant 0 : i32
    return %arg0, %c0_i32 : i32, i32
  }
  func.func @transform_1(%arg0: i32) -> (i32, i32) {
    %c0_i32 = arith.constant 0 : i32
    %c0_i32_0 = arith.constant 0 : i32
    return %arg0, %c0_i32 : i32, i32
  }
  func.func @transform_2(%arg0: i32) -> (i32, i32) {
    %c0_i32 = arith.constant 0 : i32
    %c0_i32_0 = arith.constant 0 : i32
    %c0_i32_1 = arith.constant 0 : i32
    return %c0_i32, %c0_i32_0 : i32, i32
  }
  func.func @transform_3(%arg0: i32) -> (i32, i32) {
    %c0_i32 = arith.constant 0 : i32
    %c0_i32_0 = arith.constant 0 : i32
    %c0_i32_1 = arith.constant 0 : i32
    return %c0_i32, %c0_i32_0 : i32, i32
  }
  func.func @transform_4(%arg0: i32) -> (i32, i32) {
    %c0_i32 = arith.constant 0 : i32
    %c0_i32_0 = arith.constant 0 : i32
    %c0_i32_1 = arith.constant 0 : i32
    return %c0_i32, %c0_i32_0 : i32, i32
  }
  func.func @transform_5(%arg0: i32) -> (i32, i32) {
    %c0_i32 = arith.constant 0 : i32
    %c0_i32_0 = arith.constant 0 : i32
    return %arg0, %c0_i32 : i32, i32
  }
}

</mosaic_0001>

<llo_original>
// kernel: multimodal_forward.1
$region0: #{multimodal_forward.1}
  #allocation0 [shape = 'u32[]', space=smem, size = 0x4, offset = 0x4, fixed_abs, tag = 'smem constant byte address 0x4 - core index']
  #allocation1 [shape = 'u32[144,128]{1,0:T(1,128)}', space=vmem, size = 0x12000, scoped, tag = 'internal scratch']
  %s0 = inlined_call_operand.vmem [shape: bf16[128,512], index: 0, kind: input, shape index: {}]
  %s1 = inlined_call_operand.vmem [shape: bf16[128,6144], index: 1, kind: input, shape index: {}]
  %s2 = inlined_call_operand.vmem [shape: bf16[512,128], index: 2, kind: input, shape index: {}]
  %s3 = inlined_call_operand.vmem [shape: bf16[768,128], index: 3, kind: input, shape index: {}]
  %s4 = inlined_call_operand.vmem [shape: f32[1,128], index: 4, kind: input, shape index: {}]
  %s5 = inlined_call_operand.vmem [shape: bf16[128,128], index: 5, kind: output, shape index: {}]
  %s6 = sld [smem:[#allocation0]]
  $region76: #{multimodal_forward.1} parent=0
    _
  %s8 = ssub.s32 1, %s6
  %s9 = scalar_select 0, %s8, %s6
  $region1: #{multimodal_forward.1} parent=0
    #allocation2 [shape = 'u8[98304]{0}', space=vmem, size = 0x18000, scoped, tag = 'input window, operand 1']
    loop: start=0, step=1, limit=6
    $region2: #{multimodal_forward.1} parent=1 // loop_pre_header
      _
    $region3: #{multimodal_forward.1} parent=1 // loop_header
      %s11 = sphi 0, %s15
      %p12 = scmp.ge.s32.totalorder %s11, 6
      %s21 = sphi 0, %s23
      %s24 = sphi 0, %s21
      %s25 = sphi 0, %s24
      %s41 = sphi 0, %s25
      %s47 = sphi 0, %s49
      %s50 = sphi 0, %s47
      %s51 = sphi 0, %s50
      %s67 = sphi 0, %s51
      %s71 = sphi 0, %s71
      %s73 = sphi 0, %s71
      %s74 = sphi 0, %s73
      %s88 = sphi 0, %s74
      %s92 = sphi 0, %s92
      %s94 = sphi 0, %s92
      %s95 = sphi 0, %s94
      %s109 = sphi 0, %s95
      %s113 = sphi 0, %s113
      %s115 = sphi 0, %s113
      %s116 = sphi 0, %s115
      %s130 = sphi 0, %s116
      %s136 = sphi 0, %s138
      %s139 = sphi 0, %s136
      %s140 = sphi 0, %s139
      %s156 = sphi 0, %s140
    $region4: #{multimodal_forward.1} parent=1 // loop_header_branch
      %14 = sbr.rel (%p12) target = $region8
    $region5: #{multimodal_forward.1} parent=1 // loop_body
      %s16 = ssub.s32 %s11, 1
      %s17 = ssub.s32 %s11, 2
      %s18 = sadd.s32 %s11, 1
      %s19 = ssub.s32 %s11, %s18
      %p20 = scmp.eq.s32.totalorder %s19, 0
      %s22 = sadd.s32 %s21, 1
      %s23 = scalar_select %p20, %s21, %s22
      %p26 = pneg %p20
      %p27 = scmp.eq.s32.totalorder %s11, 3
      %p28 = por %p26, %p27
      %p29 = scmp.ne.s32.totalorder %s21, %s24
      %p30 = scmp.eq.s32.totalorder %s11, 0
      %p31 = por %p29, %p30
      %p32 = scmp.ne.s32.totalorder %s21, %s24
      %p33 = scmp.eq.s32.totalorder %s16, 3
      %p34 = por %p32, %p33
      %p35 = scmp.ne.s32.totalorder %s24, %s25
      %p36 = scmp.eq.s32.totalorder %s16, 0
      %p37 = por %p35, %p36
      %p38 = scmp.ne.s32.totalorder %s24, %s25
      %p39 = scmp.eq.s32.totalorder %s17, 3
      %p40 = por %p38, %p39
      %p42 = scmp.ne.s32.totalorder %s25, %s41
      %p43 = scmp.eq.s32.totalorder %s17, 0
      %p44 = por %p42, %p43
      %s45 = ssub.s32 %s11, %s18
      %p46 = scmp.eq.s32.totalorder %s45, 0
      %s48 = sadd.s32 %s47, 1
      %s49 = scalar_select %p46, %s47, %s48
      %p52 = pneg %p46
      %p53 = scmp.eq.s32.totalorder %s11, 3
      %p54 = por %p52, %p53
      %p55 = scmp.ne.s32.totalorder %s47, %s50
      %p56 = scmp.eq.s32.totalorder %s11, 0
      %p57 = por %p55, %p56
      %p58 = scmp.ne.s32.totalorder %s47, %s50
      %p59 = scmp.eq.s32.totalorder %s16, 3
      %p60 = por %p58, %p59
      %p61 = scmp.ne.s32.totalorder %s50, %s51
      %p62 = scmp.eq.s32.totalorder %s16, 0
      %p63 = por %p61, %p62
      %p64 = scmp.ne.s32.totalorder %s50, %s51
      %p65 = scmp.eq.s32.totalorder %s17, 3
      %p66 = por %p64, %p65
      %p68 = scmp.ne.s32.totalorder %s51, %s67
      %p69 = scmp.eq.s32.totalorder %s17, 0
      %p70 = por %p68, %p69
      %s72 = sadd.s32 %s71, 1
      %p75 = scmp.eq.s32.totalorder %s11, 3
      %p76 = scmp.ne.s32.totalorder %s71, %s73
      %p77 = scmp.eq.s32.totalorder %s11, 0
      %p78 = por %p76, %p77
      %p79 = scmp.ne.s32.totalorder %s71, %s73
      %p80 = scmp.eq.s32.totalorder %s16, 3
      %p81 = por %p79, %p80
      %p82 = scmp.ne.s32.totalorder %s73, %s74
      %p83 = scmp.eq.s32.totalorder %s16, 0
      %p84 = por %p82, %p83
      %p85 = scmp.ne.s32.totalorder %s73, %s74
      %p86 = scmp.eq.s32.totalorder %s17, 3
      %p87 = por %p85, %p86
      %p89 = scmp.ne.s32.totalorder %s74, %s88
      %p90 = scmp.eq.s32.totalorder %s17, 0
      %p91 = por %p89, %p90
      %s93 = sadd.s32 %s92, 1
      %p96 = scmp.eq.s32.totalorder %s11, 3
      %p97 = scmp.ne.s32.totalorder %s92, %s94
      %p98 = scmp.eq.s32.totalorder %s11, 0
      %p99 = por %p97, %p98
      %p100 = scmp.ne.s32.totalorder %s92, %s94
      %p101 = scmp.eq.s32.totalorder %s16, 3
      %p102 = por %p100, %p101
      %p103 = scmp.ne.s32.totalorder %s94, %s95
      %p104 = scmp.eq.s32.totalorder %s16, 0
      %p105 = por %p103, %p104
      %p106 = scmp.ne.s32.totalorder %s94, %s95
      %p107 = scmp.eq.s32.totalorder %s17, 3
      %p108 = por %p106, %p107
      %p110 = scmp.ne.s32.totalorder %s95, %s109
      %p111 = scmp.eq.s32.totalorder %s17, 0
      %p112 = por %p110, %p111
      %s114 = sadd.s32 %s113, 1
      %p117 = scmp.eq.s32.totalorder %s11, 3
      %p118 = scmp.ne.s32.totalorder %s113, %s115
      %p119 = scmp.eq.s32.totalorder %s11, 0
      %p120 = por %p118, %p119
      %p121 = scmp.ne.s32.totalorder %s113, %s115
      %p122 = scmp.eq.s32.totalorder %s16, 3
      %p123 = por %p121, %p122
      %p124 = scmp.ne.s32.totalorder %s115, %s116
      %p125 = scmp.eq.s32.totalorder %s16, 0
      %p126 = por %p124, %p125
      %p127 = scmp.ne.s32.totalorder %s115, %s116
      %p128 = scmp.eq.s32.totalorder %s17, 3
      %p129 = por %p127, %p128
      %p131 = scmp.ne.s32.totalorder %s116, %s130
      %p132 = scmp.eq.s32.totalorder %s17, 0
      %p133 = por %p131, %p132
      %s134 = ssub.s32 %s11, %s18
      %p135 = scmp.eq.s32.totalorder %s134, 0
      %s137 = sadd.s32 %s136, 1
      %s138 = scalar_select %p135, %s136, %s137
      %p141 = pneg %p135
      %p142 = scmp.eq.s32.totalorder %s11, 3
      %p143 = por %p141, %p142
      %p144 = scmp.ne.s32.totalorder %s136, %s139
      %p145 = scmp.eq.s32.totalorder %s11, 0
      %p146 = por %p144, %p145
      %p147 = scmp.ne.s32.totalorder %s136, %s139
      %p148 = scmp.eq.s32.totalorder %s16, 3
      %p149 = por %p147, %p148
      %p150 = scmp.ne.s32.totalorder %s139, %s140
      %p151 = scmp.eq.s32.totalorder %s16, 0
      %p152 = por %p150, %p151
      %p153 = scmp.ne.s32.totalorder %s139, %s140
      %p154 = scmp.eq.s32.totalorder %s17, 3
      %p155 = por %p153, %p154
      %p157 = scmp.ne.s32.totalorder %s140, %s156
      %p158 = scmp.eq.s32.totalorder %s17, 0
      %p159 = por %p157, %p158
      %p160 = scmp.le.s32.totalorder 1, %s11
      %p161 = scmp.lt.s32.totalorder %s11, 5
      %p162 = pnand %p160, %p161
      %p163 = pneg %p162
      // Predicated region
      $region9: #{multimodal_forward.1} parent=5 // pred_check
        _
      $region10: #{multimodal_forward.1} parent=5 // pred_check_branch
        %165 = sbr.rel (%p162) target = $region12
      $region11: #{multimodal_forward.1} parent=5 // pred_region
        %s166 = ssub.s32 %s11, 1
        // Predicated region
        $region13: #{multimodal_forward.1} parent=11 // pred_check
          %p167 = pneg %p84
        $region14: #{multimodal_forward.1} parent=11 // pred_check_branch
          %169 = sbr.rel (%p167) target = $region16
        $region15: #{multimodal_forward.1} parent=11 // pred_region
          _
        $region16: #{multimodal_forward.1} parent=11 // pred_fallthru
          _
        // Predicated region
        $region17: #{multimodal_forward.1} parent=11 // pred_check
          %p170 = pneg %p105
        $region18: #{multimodal_forward.1} parent=11 // pred_check_branch
          %172 = sbr.rel (%p170) target = $region20
        $region19: #{multimodal_forward.1} parent=11 // pred_region
          _
        $region20: #{multimodal_forward.1} parent=11 // pred_fallthru
          _
        // Predicated region
        $region21: #{multimodal_forward.1} parent=11 // pred_check
          %p173 = pneg %p126
        $region22: #{multimodal_forward.1} parent=11 // pred_check_branch
          %175 = sbr.rel (%p173) target = $region24
        $region23: #{multimodal_forward.1} parent=11 // pred_region
          _
        $region24: #{multimodal_forward.1} parent=11 // pred_fallthru
          _
      $region12: #{multimodal_forward.1} parent=5 // pred_fallthru
        _
      %p176 = scmp.lt.s32.totalorder %s11, 4
      // Predicated region
      $region25: #{multimodal_forward.1} parent=5 // pred_check
        %p177 = pneg %p176
      $region26: #{multimodal_forward.1} parent=5 // pred_check_branch
        %179 = sbr.rel (%p177) target = $region28
      $region27: #{multimodal_forward.1} parent=5 // pred_region
        // Predicated region
        $region29: #{multimodal_forward.1} parent=27 // pred_check
          %p180 = pneg %p31
        $region30: #{multimodal_forward.1} parent=27 // pred_check_branch
          %182 = sbr.rel (%p180) target = $region32
        $region31: #{multimodal_forward.1} parent=27 // pred_region
          %s183 = smul.u32 4, %s11
          %p184 = scmp.lt.s32.totalorder %s183, 15
          %s185 = scalar_select %p184, %s183, 15
          %s186 = smul.addr %s185, 4
          %s187 = smul.addr %s186, 4
          %s188 = scalar_lea.vmem %s0, %s187
          %s189 = smul.u32 4, %s11
        $region32: #{multimodal_forward.1} parent=27 // pred_fallthru
          _
        // Predicated region
        $region33: #{multimodal_forward.1} parent=27 // pred_check
          %p190 = pneg %p57
        $region34: #{multimodal_forward.1} parent=27 // pred_check_branch
          %192 = sbr.rel (%p190) target = $region36
        $region35: #{multimodal_forward.1} parent=27 // pred_region
          %s193 = sand.u32 %s47, 1
          %s194 = sand.u32 %s47, 1
          %s195 = smul.addr %s194, 96
          %s196 = scalar_lea.vmem [#allocation2], %s195
          %s197 = smul.u32 4, %s11
          %s198 = smul.addr %s197, 48
          %s199 = smul.addr %s198, 4
          %s200 = scalar_lea.vmem %s1, %s199
          // Predicated region
          $region37: #{multimodal_forward.1} parent=35 // pred_check
            _
          $region38: #{multimodal_forward.1} parent=35 // pred_check_branch
            %202 = sbr.rel (0) target = $region40
          $region39: #{multimodal_forward.1} parent=35 // pred_region
            // Predicated region
            $region41: #{multimodal_forward.1} parent=39 // pred_check
              _
            $region42: #{multimodal_forward.1} parent=39 // pred_check_branch
              %204 = sbr.rel (0) target = $region44
            $region43: #{multimodal_forward.1} parent=39 // pred_region
              loop: start=0, step=1, limit=1
              $region45: #{multimodal_forward.1} parent=43 // loop_pre_header
                _
              $region46: #{multimodal_forward.1} parent=43 // loop_header
                %s206 = sphi 0, %s210
                %p207 = scmp.ge.s32.totalorder %s206, 1
                %s211 = sphi %s200, %s200
                %s212 = sphi %s196, %s196
              $region47: #{multimodal_forward.1} parent=43 // loop_header_branch
                %209 = sbr.rel (%p207) target = $region51
              $region48: #{multimodal_forward.1} parent=43 // loop_body
                %v213 = vld [vmem:[%s211] sm:$0xff]
                %214 = vst [vmem:[%s212] sm:$0xff] %v213
                %v215 = vld [vmem:[%s211 + $0x8] sm:$0xff]
                %216 = vst [vmem:[%s212 + $0x8] sm:$0xff] %v215
                %v217 = vld [vmem:[%s211 + $0x10] sm:$0xff]
                %218 = vst [vmem:[%s212 + $0x10] sm:$0xff] %v217
                %v219 = vld [vmem:[%s211 + $0xc0] sm:$0xff]
                %220 = vst [vmem:[%s212 + $0x18] sm:$0xff] %v219
                %v221 = vld [vmem:[%s211 + $0xc8] sm:$0xff]
                %222 = vst [vmem:[%s212 + $0x20] sm:$0xff] %v221
                %v223 = vld [vmem:[%s211 + $0xd0] sm:$0xff]
                %224 = vst [vmem:[%s212 + $0x28] sm:$0xff] %v223
                %v225 = vld [vmem:[%s211 + $0x180] sm:$0xff]
                %226 = vst [vmem:[%s212 + $0x30] sm:$0xff] %v225
                %v227 = vld [vmem:[%s211 + $0x188] sm:$0xff]
                %228 = vst [vmem:[%s212 + $0x38] sm:$0xff] %v227
                %v229 = vld [vmem:[%s211 + $0x190] sm:$0xff]
                %230 = vst [vmem:[%s212 + $0x40] sm:$0xff] %v229
                %v231 = vld [vmem:[%s211 + $0x240] sm:$0xff]
                %232 = vst [vmem:[%s212 + $0x48] sm:$0xff] %v231
                %v233 = vld [vmem:[%s211 + $0x248] sm:$0xff]
                %234 = vst [vmem:[%s212 + $0x50] sm:$0xff] %v233
                %v235 = vld [vmem:[%s211 + $0x250] sm:$0xff]
                %236 = vst [vmem:[%s212 + $0x58] sm:$0xff] %v235
              $region49: #{multimodal_forward.1} parent=43 // loop_footer
                %s210 = sadd.s32 1, %s206
              $region50: #{multimodal_forward.1} parent=43 // loop_footer_branch
                %205 = sbr.rel target = $region46
              $region51: #{multimodal_forward.1} parent=43 // loop_exit
                _
            $region44: #{multimodal_forward.1} parent=39 // pred_fallthru
              _
            // Predicated region
            $region52: #{multimodal_forward.1} parent=39 // pred_check
              _
            $region53: #{multimodal_forward.1} parent=39 // pred_check_branch
              %238 = sbr.rel target = $region55
            $region54: #{multimodal_forward.1} parent=39 // pred_region
              _
            $region55: #{multimodal_forward.1} parent=39 // pred_fallthru
              _
          $region40: #{multimodal_forward.1} parent=35 // pred_fallthru
            _
          %239 = vnop
        $region36: #{multimodal_forward.1} parent=27 // pred_fallthru
          _
      $region28: #{multimodal_forward.1} parent=5 // pred_fallthru
        _
      %p240 = scmp.le.s32.totalorder 1, %s11
      %p241 = scmp.lt.s32.totalorder %s11, 5
      %p242 = pnand %p240, %p241
      %p243 = pneg %p242
      // Predicated region
      $region56: #{multimodal_forward.1} parent=5 // pred_check
        _
      $region57: #{multimodal_forward.1} parent=5 // pred_check_branch
        %245 = sbr.rel (%p242) target = $region59
      $region58: #{multimodal_forward.1} parent=5 // pred_region
        %s246 = ssub.s32 %s11, 1
        %s247 = sand.u32 %s50, 1
        %s248 = sand.u32 %s50, 1
        %s249 = smul.addr %s248, 96
        %s250 = scalar_lea.vmem [#allocation2], %s249
        // Predicated region
        $region60: #{multimodal_forward.1} parent=58 // pred_check
          %p251 = pneg %p63
        $region61: #{multimodal_forward.1} parent=58 // pred_check_branch
          %253 = sbr.rel (%p251) target = $region63
        $region62: #{multimodal_forward.1} parent=58 // pred_region
          _
        $region63: #{multimodal_forward.1} parent=58 // pred_fallthru
          _
        %s254 = smul.u32 4, %s16
        %p255 = scmp.lt.s32.totalorder %s254, 15
        %s256 = scalar_select %p255, %s254, 15
        %s257 = smul.addr %s256, 4
        %s258 = smul.addr %s257, 4
        %s259 = scalar_lea.vmem %s0, %s258
        %p260 = pneg %p37
        %p261 = pneg %p34
        %s262 = sand.u32 %s50, 1
        %s263 = sand.u32 %s50, 1
        %s264 = smul.addr %s263, 96
        %s265 = scalar_lea.vmem [#allocation2], %s264
        %p266 = pneg %p63
        %p267 = pneg %p60
        %p268 = pneg %p84
        %p269 = pneg %p81
        %p270 = pneg %p105
        %p271 = pneg %p102
        %p272 = pneg %p126
        %p273 = pneg %p123
        %p274 = pneg %p152
        %p275 = pneg %p149
        %s276 = smul.u32 4, %s16
        %p277 = scmp.lt.s32.totalorder %s276, 15
        %s278 = scalar_select %p277, %s276, 15
        %s279 = smul.addr %s278, 4
        %s280 = scalar_lea.vmem %s5, %s279
        %s281 = smul.u32 4, %s16
        %p282 = scmp.lt.s32.totalorder %s281, 15
        %s283 = scalar_select %p282, %s281, 15
        %s284 = smul.addr %s283, 4
        %s285 = smul.addr %s284, 4
        %s286 = scalar_lea.vmem %s0, %s285
        %s287 = smul.u32 4, %s16
        %s288 = smul.u32 4, %s16
        %s289 = smul.u32 4, %s16
        %p290 = scmp.lt.s32.totalorder %s289, 15
        %s291 = scalar_select %p290, %s289, 15
        %s292 = smul.addr %s291, 4
        %s293 = scalar_lea.vmem %s5, %s292
        %s294 = smul.u32 4, %s16
        %v296 = vld [vmem:[%s286] sm:$0xff]
        %v297 = vld [vmem:[%s286 + $0x8] sm:$0xff]
        %v298 = vld [vmem:[%s286 + $0x10] sm:$0xff]
        %v299 = vld [vmem:[%s286 + $0x18] sm:$0xff]
        %v300 = vld [vmem:[%s286 + $0x20] sm:$0xff]
        %v301 = vld [vmem:[%s286 + $0x28] sm:$0xff]
        %v302 = vld [vmem:[%s286 + $0x30] sm:$0xff]
        %v303 = vld [vmem:[%s286 + $0x38] sm:$0xff]
        %v304 = vld [vmem:[%s2] sm:$0xf]
        %v305 = vld [vmem:[%s2 + $0x4] sm:$0xf]
        %v306 = vld [vmem:[%s2 + $0x8] sm:$0xf]
        %v307 = vld [vmem:[%s2 + $0xc] sm:$0xf]
        %v308 = vld [vmem:[%s2 + $0x10] sm:$0xf]
        %v309 = vld [vmem:[%s2 + $0x14] sm:$0xf]
        %v310 = vld [vmem:[%s2 + $0x18] sm:$0xf]
        %v311 = vld [vmem:[%s2 + $0x1c] sm:$0xf]
        %v312 = vld [vmem:[%s2 + $0x20] sm:$0xf]
        %v313 = vld [vmem:[%s2 + $0x24] sm:$0xf]
        %v314 = vld [vmem:[%s2 + $0x28] sm:$0xf]
        %v315 = vld [vmem:[%s2 + $0x2c] sm:$0xf]
        %v316 = vld [vmem:[%s2 + $0x30] sm:$0xf]
        %v317 = vld [vmem:[%s2 + $0x34] sm:$0xf]
        %v318 = vld [vmem:[%s2 + $0x38] sm:$0xf]
        %v319 = vld [vmem:[%s2 + $0x3c] sm:$0xf]
        %v320 = vld [vmem:[%s2 + $0x40] sm:$0xf]
        %v321 = vld [vmem:[%s2 + $0x44] sm:$0xf]
        %v322 = vld [vmem:[%s2 + $0x48] sm:$0xf]
        %v323 = vld [vmem:[%s2 + $0x4c] sm:$0xf]
        %v324 = vld [vmem:[%s2 + $0x50] sm:$0xf]
        %v325 = vld [vmem:[%s2 + $0x54] sm:$0xf]
        %v326 = vld [vmem:[%s2 + $0x58] sm:$0xf]
        %v327 = vld [vmem:[%s2 + $0x5c] sm:$0xf]
        %v328 = vld [vmem:[%s2 + $0x60] sm:$0xf]
        %v329 = vld [vmem:[%s2 + $0x64] sm:$0xf]
        %v330 = vld [vmem:[%s2 + $0x68] sm:$0xf]
        %v331 = vld [vmem:[%s2 + $0x6c] sm:$0xf]
        %v332 = vld [vmem:[%s2 + $0x70] sm:$0xf]
        %v333 = vld [vmem:[%s2 + $0x74] sm:$0xf]
        %v334 = vld [vmem:[%s2 + $0x78] sm:$0xf]
        %v335 = vld [vmem:[%s2 + $0x7c] sm:$0xf]
        %v336 = vld [vmem:[%s2 + $0x80] sm:$0xf]
        %v337 = vld [vmem:[%s2 + $0x84] sm:$0xf]
        %v338 = vld [vmem:[%s2 + $0x88] sm:$0xf]
        %v339 = vld [vmem:[%s2 + $0x8c] sm:$0xf]
        %v340 = vld [vmem:[%s2 + $0x90] sm:$0xf]
        %v341 = vld [vmem:[%s2 + $0x94] sm:$0xf]
        %v342 = vld [vmem:[%s2 + $0x98] sm:$0xf]
        %v343 = vld [vmem:[%s2 + $0x9c] sm:$0xf]
        %v344 = vld [vmem:[%s2 + $0xa0] sm:$0xf]
        %v345 = vld [vmem:[%s2 + $0xa4] sm:$0xf]
        %v346 = vld [vmem:[%s2 + $0xa8] sm:$0xf]
        %v347 = vld [vmem:[%s2 + $0xac] sm:$0xf]
        %v348 = vld [vmem:[%s2 + $0xb0] sm:$0xf]
        %v349 = vld [vmem:[%s2 + $0xb4] sm:$0xf]
        %v350 = vld [vmem:[%s2 + $0xb8] sm:$0xf]
        %v351 = vld [vmem:[%s2 + $0xbc] sm:$0xf]
        %v352 = vld [vmem:[%s2 + $0xc0] sm:$0xf]
        %v353 = vld [vmem:[%s2 + $0xc4] sm:$0xf]
        %v354 = vld [vmem:[%s2 + $0xc8] sm:$0xf]
        %v355 = vld [vmem:[%s2 + $0xcc] sm:$0xf]
        %v356 = vld [vmem:[%s2 + $0xd0] sm:$0xf]
        %v357 = vld [vmem:[%s2 + $0xd4] sm:$0xf]
        %v358 = vld [vmem:[%s2 + $0xd8] sm:$0xf]
        %v359 = vld [vmem:[%s2 + $0xdc] sm:$0xf]
        %v360 = vld [vmem:[%s2 + $0xe0] sm:$0xf]
        %v361 = vld [vmem:[%s2 + $0xe4] sm:$0xf]
        %v362 = vld [vmem:[%s2 + $0xe8] sm:$0xf]
        %v363 = vld [vmem:[%s2 + $0xec] sm:$0xf]
        %v364 = vld [vmem:[%s2 + $0xf0] sm:$0xf]
        %v365 = vld [vmem:[%s2 + $0xf4] sm:$0xf]
        %v366 = vld [vmem:[%s2 + $0xf8] sm:$0xf]
        %v367 = vld [vmem:[%s2 + $0xfc] sm:$0xf]
        %v368 = vld [vmem:[%s250] sm:$0xff]
        %v369 = vld [vmem:[%s250 + $0x8] sm:$0xff]
        %v370 = vld [vmem:[%s250 + $0x10] sm:$0xff]
        %v371 = vld [vmem:[%s250 + $0x18] sm:$0xff]
        %v372 = vld [vmem:[%s250 + $0x20] sm:$0xff]
        %v373 = vld [vmem:[%s250 + $0x28] sm:$0xff]
        %v374 = vld [vmem:[%s250 + $0x30] sm:$0xff]
        %v375 = vld [vmem:[%s250 + $0x38] sm:$0xff]
        %v376 = vld [vmem:[%s250 + $0x40] sm:$0xff]
        %v377 = vld [vmem:[%s250 + $0x48] sm:$0xff]
        %v378 = vld [vmem:[%s250 + $0x50] sm:$0xff]
        %v379 = vld [vmem:[%s250 + $0x58] sm:$0xff]
        %v380 = vld [vmem:[%s3] sm:$0xf]
        %v381 = vld [vmem:[%s3 + $0x4] sm:$0xf]
        %v382 = vld [vmem:[%s3 + $0x8] sm:$0xf]
        %v383 = vld [vmem:[%s3 + $0xc] sm:$0xf]
        %v384 = vld [vmem:[%s3 + $0x10] sm:$0xf]
        %v385 = vld [vmem:[%s3 + $0x14] sm:$0xf]
        %v386 = vld [vmem:[%s3 + $0x18] sm:$0xf]
        %v387 = vld [vmem:[%s3 + $0x1c] sm:$0xf]
        %v388 = vld [vmem:[%s3 + $0x20] sm:$0xf]
        %v389 = vld [vmem:[%s3 + $0x24] sm:$0xf]
        %v390 = vld [vmem:[%s3 + $0x28] sm:$0xf]
        %v391 = vld [vmem:[%s3 + $0x2c] sm:$0xf]
        %v392 = vld [vmem:[%s3 + $0x30] sm:$0xf]
        %v393 = vld [vmem:[%s3 + $0x34] sm:$0xf]
        %v394 = vld [vmem:[%s3 + $0x38] sm:$0xf]
        %v395 = vld [vmem:[%s3 + $0x3c] sm:$0xf]
        %v396 = vld [vmem:[%s3 + $0x40] sm:$0xf]
        %v397 = vld [vmem:[%s3 + $0x44] sm:$0xf]
        %v398 = vld [vmem:[%s3 + $0x48] sm:$0xf]
        %v399 = vld [vmem:[%s3 + $0x4c] sm:$0xf]
        %v400 = vld [vmem:[%s3 + $0x50] sm:$0xf]
        %v401 = vld [vmem:[%s3 + $0x54] sm:$0xf]
        %v402 = vld [vmem:[%s3 + $0x58] sm:$0xf]
        %v403 = vld [vmem:[%s3 + $0x5c] sm:$0xf]
        %v404 = vld [vmem:[%s3 + $0x60] sm:$0xf]
        %v405 = vld [vmem:[%s3 + $0x64] sm:$0xf]
        %v406 = vld [vmem:[%s3 + $0x68] sm:$0xf]
        %v407 = vld [vmem:[%s3 + $0x6c] sm:$0xf]
        %v408 = vld [vmem:[%s3 + $0x70] sm:$0xf]
        %v409 = vld [vmem:[%s3 + $0x74] sm:$0xf]
        %v410 = vld [vmem:[%s3 + $0x78] sm:$0xf]
        %v411 = vld [vmem:[%s3 + $0x7c] sm:$0xf]
        %v412 = vld [vmem:[%s3 + $0x80] sm:$0xf]
        %v413 = vld [vmem:[%s3 + $0x84] sm:$0xf]
        %v414 = vld [vmem:[%s3 + $0x88] sm:$0xf]
        %v415 = vld [vmem:[%s3 + $0x8c] sm:$0xf]
        %v416 = vld [vmem:[%s3 + $0x90] sm:$0xf]
        %v417 = vld [vmem:[%s3 + $0x94] sm:$0xf]
        %v418 = vld [vmem:[%s3 + $0x98] sm:$0xf]
        %v419 = vld [vmem:[%s3 + $0x9c] sm:$0xf]
        %v420 = vld [vmem:[%s3 + $0xa0] sm:$0xf]
        %v421 = vld [vmem:[%s3 + $0xa4] sm:$0xf]
        %v422 = vld [vmem:[%s3 + $0xa8] sm:$0xf]
        %v423 = vld [vmem:[%s3 + $0xac] sm:$0xf]
        %v424 = vld [vmem:[%s3 + $0xb0] sm:$0xf]
        %v425 = vld [vmem:[%s3 + $0xb4] sm:$0xf]
        %v426 = vld [vmem:[%s3 + $0xb8] sm:$0xf]
        %v427 = vld [vmem:[%s3 + $0xbc] sm:$0xf]
        %v428 = vld [vmem:[%s3 + $0xc0] sm:$0xf]
        %v429 = vld [vmem:[%s3 + $0xc4] sm:$0xf]
        %v430 = vld [vmem:[%s3 + $0xc8] sm:$0xf]
        %v431 = vld [vmem:[%s3 + $0xcc] sm:$0xf]
        %v432 = vld [vmem:[%s3 + $0xd0] sm:$0xf]
        %v433 = vld [vmem:[%s3 + $0xd4] sm:$0xf]
        %v434 = vld [vmem:[%s3 + $0xd8] sm:$0xf]
        %v435 = vld [vmem:[%s3 + $0xdc] sm:$0xf]
        %v436 = vld [vmem:[%s3 + $0xe0] sm:$0xf]
        %v437 = vld [vmem:[%s3 + $0xe4] sm:$0xf]
        %v438 = vld [vmem:[%s3 + $0xe8] sm:$0xf]
        %v439 = vld [vmem:[%s3 + $0xec] sm:$0xf]
        %v440 = vld [vmem:[%s3 + $0xf0] sm:$0xf]
        %v441 = vld [vmem:[%s3 + $0xf4] sm:$0xf]
        %v442 = vld [vmem:[%s3 + $0xf8] sm:$0xf]
        %v443 = vld [vmem:[%s3 + $0xfc] sm:$0xf]
        %v444 = vld [vmem:[%s3 + $0x100] sm:$0xf]
        %v445 = vld [vmem:[%s3 + $0x104] sm:$0xf]
        %v446 = vld [vmem:[%s3 + $0x108] sm:$0xf]
        %v447 = vld [vmem:[%s3 + $0x10c] sm:$0xf]
        %v448 = vld [vmem:[%s3 + $0x110] sm:$0xf]
        %v449 = vld [vmem:[%s3 + $0x114] sm:$0xf]
        %v450 = vld [vmem:[%s3 + $0x118] sm:$0xf]
        %v451 = vld [vmem:[%s3 + $0x11c] sm:$0xf]
        %v452 = vld [vmem:[%s3 + $0x120] sm:$0xf]
        %v453 = vld [vmem:[%s3 + $0x124] sm:$0xf]
        %v454 = vld [vmem:[%s3 + $0x128] sm:$0xf]
        %v455 = vld [vmem:[%s3 + $0x12c] sm:$0xf]
        %v456 = vld [vmem:[%s3 + $0x130] sm:$0xf]
        %v457 = vld [vmem:[%s3 + $0x134] sm:$0xf]
        %v458 = vld [vmem:[%s3 + $0x138] sm:$0xf]
        %v459 = vld [vmem:[%s3 + $0x13c] sm:$0xf]
        %v460 = vld [vmem:[%s3 + $0x140] sm:$0xf]
        %v461 = vld [vmem:[%s3 + $0x144] sm:$0xf]
        %v462 = vld [vmem:[%s3 + $0x148] sm:$0xf]
        %v463 = vld [vmem:[%s3 + $0x14c] sm:$0xf]
        %v464 = vld [vmem:[%s3 + $0x150] sm:$0xf]
        %v465 = vld [vmem:[%s3 + $0x154] sm:$0xf]
        %v466 = vld [vmem:[%s3 + $0x158] sm:$0xf]
        %v467 = vld [vmem:[%s3 + $0x15c] sm:$0xf]
        %v468 = vld [vmem:[%s3 + $0x160] sm:$0xf]
        %v469 = vld [vmem:[%s3 + $0x164] sm:$0xf]
        %v470 = vld [vmem:[%s3 + $0x168] sm:$0xf]
        %v471 = vld [vmem:[%s3 + $0x16c] sm:$0xf]
        %v472 = vld [vmem:[%s3 + $0x170] sm:$0xf]
        %v473 = vld [vmem:[%s3 + $0x174] sm:$0xf]
        %v474 = vld [vmem:[%s3 + $0x178] sm:$0xf]
        %v475 = vld [vmem:[%s3 + $0x17c] sm:$0xf]
        %v488 = vunpack.c.l.b16 %v368
        %v489 = vunpack.c.h.b16 %v368
        %v490 = vunpack.c.l.b16 %v369
        %v491 = vunpack.c.h.b16 %v369
        %v492 = vunpack.c.l.b16 %v370
        %v493 = vunpack.c.h.b16 %v370
        %v494 = vunpack.c.l.b16 %v371
        %v495 = vunpack.c.h.b16 %v371
        %v496 = vunpack.c.l.b16 %v372
        %v497 = vunpack.c.h.b16 %v372
        %v498 = vunpack.c.l.b16 %v373
        %v499 = vunpack.c.h.b16 %v373
        %v500 = vunpack.c.l.b16 %v374
        %v501 = vunpack.c.h.b16 %v374
        %v502 = vunpack.c.l.b16 %v375
        %v503 = vunpack.c.h.b16 %v375
        %v504 = vunpack.c.l.b16 %v376
        %v505 = vunpack.c.h.b16 %v376
        %v506 = vunpack.c.l.b16 %v377
        %v507 = vunpack.c.h.b16 %v377
        %v508 = vunpack.c.l.b16 %v378
        %v509 = vunpack.c.h.b16 %v378
        %v510 = vunpack.c.l.b16 %v379
        %v511 = vunpack.c.h.b16 %v379
        %v512 = vpack.c.b16 %v494, %v488
        %v513 = vpack.c.b16 %v495, %v489
        %v514 = vpack.c.b16 %v496, %v490
        %v515 = vpack.c.b16 %v497, %v491
        %v516 = vpack.c.b16 %v498, %v492
        %v517 = vpack.c.b16 %v499, %v493
        %v518 = vpack.c.b16 %v506, %v500
        %v519 = vpack.c.b16 %v507, %v501
        %v520 = vpack.c.b16 %v508, %v502
        %v521 = vpack.c.b16 %v509, %v503
        %v522 = vpack.c.b16 %v510, %v504
        %v523 = vpack.c.b16 %v511, %v505
        %v632 = vunpack.c.l.b16 %v380
        %v633 = vunpack.c.l.b16 %v381
        %v634 = vunpack.c.l.b16 %v382
        %v635 = vunpack.c.l.b16 %v383
        %v636 = vunpack.c.l.b16 %v384
        %v637 = vunpack.c.l.b16 %v385
        %v638 = vunpack.c.l.b16 %v386
        %v639 = vunpack.c.l.b16 %v387
        %v640 = vunpack.c.l.b16 %v388
        %v641 = vunpack.c.l.b16 %v389
        %v642 = vunpack.c.l.b16 %v390
        %v643 = vunpack.c.l.b16 %v391
        %v644 = vunpack.c.l.b16 %v392
        %v645 = vunpack.c.l.b16 %v393
        %v646 = vunpack.c.l.b16 %v394
        %v647 = vunpack.c.l.b16 %v395
        %v648 = vunpack.c.l.b16 %v396
        %v649 = vunpack.c.l.b16 %v397
        %v650 = vunpack.c.l.b16 %v398
        %v651 = vunpack.c.l.b16 %v399
        %v652 = vunpack.c.l.b16 %v400
        %v653 = vunpack.c.l.b16 %v401
        %v654 = vunpack.c.l.b16 %v402
        %v655 = vunpack.c.l.b16 %v403
        %v656 = vunpack.c.l.b16 %v404
        %v657 = vunpack.c.l.b16 %v405
        %v658 = vunpack.c.l.b16 %v406
        %v659 = vunpack.c.l.b16 %v407
        %v660 = vunpack.c.l.b16 %v408
        %v661 = vunpack.c.l.b16 %v409
        %v662 = vunpack.c.l.b16 %v410
        %v663 = vunpack.c.l.b16 %v411
        %v664 = vunpack.c.l.b16 %v412
        %v665 = vunpack.c.l.b16 %v413
        %v666 = vunpack.c.l.b16 %v414
        %v667 = vunpack.c.l.b16 %v415
        %v668 = vunpack.c.l.b16 %v416
        %v669 = vunpack.c.l.b16 %v417
        %v670 = vunpack.c.l.b16 %v418
        %v671 = vunpack.c.l.b16 %v419
        %v672 = vunpack.c.l.b16 %v420
        %v673 = vunpack.c.l.b16 %v421
        %v674 = vunpack.c.l.b16 %v422
        %v675 = vunpack.c.l.b16 %v423
        %v676 = vunpack.c.l.b16 %v424
        %v677 = vunpack.c.l.b16 %v425
        %v678 = vunpack.c.l.b16 %v426
        %v679 = vunpack.c.l.b16 %v427
        %v680 = vunpack.c.l.b16 %v428
        %v681 = vunpack.c.l.b16 %v429
        %v682 = vunpack.c.l.b16 %v430
        %v683 = vunpack.c.l.b16 %v431
        %v684 = vunpack.c.l.b16 %v432
        %v685 = vunpack.c.l.b16 %v433
        %v686 = vunpack.c.l.b16 %v434
        %v687 = vunpack.c.l.b16 %v435
        %v688 = vunpack.c.l.b16 %v436
        %v689 = vunpack.c.l.b16 %v437
        %v690 = vunpack.c.l.b16 %v438
        %v691 = vunpack.c.l.b16 %v439
        %v692 = vunpack.c.l.b16 %v440
        %v693 = vunpack.c.l.b16 %v441
        %v694 = vunpack.c.l.b16 %v442
        %v695 = vunpack.c.l.b16 %v443
        %v696 = vunpack.c.l.b16 %v444
        %v697 = vunpack.c.l.b16 %v445
        %v698 = vunpack.c.l.b16 %v446
        %v699 = vunpack.c.l.b16 %v447
        %v700 = vunpack.c.l.b16 %v448
        %v701 = vunpack.c.l.b16 %v449
        %v702 = vunpack.c.l.b16 %v450
        %v703 = vunpack.c.l.b16 %v451
        %v704 = vunpack.c.l.b16 %v452
        %v705 = vunpack.c.l.b16 %v453
        %v706 = vunpack.c.l.b16 %v454
        %v707 = vunpack.c.l.b16 %v455
        %v708 = vunpack.c.l.b16 %v456
        %v709 = vunpack.c.l.b16 %v457
        %v710 = vunpack.c.l.b16 %v458
        %v711 = vunpack.c.l.b16 %v459
        %v712 = vunpack.c.l.b16 %v460
        %v713 = vunpack.c.l.b16 %v461
        %v714 = vunpack.c.l.b16 %v462
        %v715 = vunpack.c.l.b16 %v463
        %v716 = vunpack.c.l.b16 %v464
        %v717 = vunpack.c.l.b16 %v465
        %v718 = vunpack.c.l.b16 %v466
        %v719 = vunpack.c.l.b16 %v467
        %v720 = vunpack.c.l.b16 %v468
        %v721 = vunpack.c.l.b16 %v469
        %v722 = vunpack.c.l.b16 %v470
        %v723 = vunpack.c.l.b16 %v471
        %v724 = vunpack.c.l.b16 %v472
        %v725 = vunpack.c.l.b16 %v473
        %v726 = vunpack.c.l.b16 %v474
        %v727 = vunpack.c.l.b16 %v475
        %v728 = vpack.c.b16 %v633, %v632
        %v729 = vpack.c.b16 %v635, %v634
        %v730 = vpack.c.b16 %v637, %v636
        %v731 = vpack.c.b16 %v639, %v638
        %v732 = vpack.c.b16 %v641, %v640
        %v733 = vpack.c.b16 %v643, %v642
        %v734 = vpack.c.b16 %v645, %v644
        %v735 = vpack.c.b16 %v647, %v646
        %v736 = vpack.c.b16 %v649, %v648
        %v737 = vpack.c.b16 %v651, %v650
        %v738 = vpack.c.b16 %v653, %v652
        %v739 = vpack.c.b16 %v655, %v654
        %v740 = vpack.c.b16 %v657, %v656
        %v741 = vpack.c.b16 %v659, %v658
        %v742 = vpack.c.b16 %v661, %v660
        %v743 = vpack.c.b16 %v663, %v662
        %v744 = vpack.c.b16 %v665, %v664
        %v745 = vpack.c.b16 %v667, %v666
        %v746 = vpack.c.b16 %v669, %v668
        %v747 = vpack.c.b16 %v671, %v670
        %v748 = vpack.c.b16 %v673, %v672
        %v749 = vpack.c.b16 %v675, %v674
        %v750 = vpack.c.b16 %v677, %v676
        %v751 = vpack.c.b16 %v679, %v678
        %v752 = vpack.c.b16 %v681, %v680
        %v753 = vpack.c.b16 %v683, %v682
        %v754 = vpack.c.b16 %v685, %v684
        %v755 = vpack.c.b16 %v687, %v686
        %v756 = vpack.c.b16 %v689, %v688
        %v757 = vpack.c.b16 %v691, %v690
        %v758 = vpack.c.b16 %v693, %v692
        %v759 = vpack.c.b16 %v695, %v694
        %v760 = vpack.c.b16 %v697, %v696
        %v761 = vpack.c.b16 %v699, %v698
        %v762 = vpack.c.b16 %v701, %v700
        %v763 = vpack.c.b16 %v703, %v702
        %v764 = vpack.c.b16 %v705, %v704
        %v765 = vpack.c.b16 %v707, %v706
        %v766 = vpack.c.b16 %v709, %v708
        %v767 = vpack.c.b16 %v711, %v710
        %v768 = vpack.c.b16 %v713, %v712
        %v769 = vpack.c.b16 %v715, %v714
        %v770 = vpack.c.b16 %v717, %v716
        %v771 = vpack.c.b16 %v719, %v718
        %v772 = vpack.c.b16 %v721, %v720
        %v773 = vpack.c.b16 %v723, %v722
        %v774 = vpack.c.b16 %v725, %v724
        %v775 = vpack.c.b16 %v727, %v726
        %824 = vmatprep.subr.bf16.mxu0 0
        %825 = vmatpush1.bf16.msra.mxu0 %v735
        %826 = vmatprep.subr.bf16.mxu0 0
        %827 = vmatpush1.bf16.msra.mxu0 %v734
        %828 = vmatprep.subr.bf16.mxu0 0
        %829 = vmatpush1.bf16.msra.mxu0 %v733
        %830 = vmatprep.subr.bf16.mxu0 0
        %831 = vmatpush1.bf16.msra.mxu0 %v732
        %832 = vmatprep.subr.bf16.mxu0 0
        %833 = vmatpush1.bf16.msra.mxu0 %v731
        %834 = vmatprep.subr.bf16.mxu0 0
        %835 = vmatpush1.bf16.msra.mxu0 %v730
        %836 = vmatprep.subr.bf16.mxu0 0
        %837 = vmatpush1.bf16.msra.mxu0 %v729
        %838 = vmatprep.subr.bf16.mxu0 0
        %839 = vmatpush1.bf16.msra.mxu0 %v728
        %840 = vmatprep.subr.bf16.mxu0 0
        %841 = vmatpush2.bf16.msra.mxu0 %v743
        %842 = vmatprep.subr.bf16.mxu0 0
        %843 = vmatpush2.bf16.msra.mxu0 %v742
        %844 = vmatprep.subr.bf16.mxu0 0
        %845 = vmatpush2.bf16.msra.mxu0 %v741
        %846 = vmatprep.subr.bf16.mxu0 0
        %847 = vmatpush2.bf16.msra.mxu0 %v740
        %848 = vmatprep.subr.bf16.mxu0 0
        %849 = vmatpush2.bf16.msra.mxu0 %v739
        %850 = vmatprep.subr.bf16.mxu0 0
        %851 = vmatpush2.bf16.msra.mxu0 %v738
        %852 = vmatprep.subr.bf16.mxu0 0
        %853 = vmatpush2.bf16.msra.mxu0 %v737
        %854 = vmatprep.subr.bf16.mxu0 0
        %855 = vmatpush2.bf16.msra.mxu0 %v736
        %856 = vmatprep.mubr.bf16.mxu0 %v513
        %857 = vmatmul.mubr.bf16.gmra.mxu0 %v512
        %v858 = vpop.f32.mrf.mxu0
        %v859 = vadd.f32 0.0, %v858
        %v860 = vpop.f32.mrf.mxu0
        %v861 = vpop.f32.mrf.mxu0
        %v862 = vadd.f32 0.0, %v861
        %v863 = vpop.f32.mrf.mxu0
        %864 = vmatprep.mubr.bf16.mxu0 %v519
        %865 = vmatmul.mubr.bf16.gmra.mxu0 %v518
        %v866 = vpop.f32.mrf.mxu0
        %v867 = vadd.f32 0.0, %v866
        %v868 = vpop.f32.mrf.mxu0
        %v869 = vpop.f32.mrf.mxu0
        %v870 = vadd.f32 0.0, %v869
        %v871 = vpop.f32.mrf.mxu0
        %872 = vdwg.mxu0
        %873 = vmatprep.subr.bf16.mxu0 0
        %874 = vmatpush1.bf16.msra.mxu0 %v751
        %875 = vmatprep.subr.bf16.mxu0 0
        %876 = vmatpush1.bf16.msra.mxu0 %v750
        %877 = vmatprep.subr.bf16.mxu0 0
        %878 = vmatpush1.bf16.msra.mxu0 %v749
        %879 = vmatprep.subr.bf16.mxu0 0
        %880 = vmatpush1.bf16.msra.mxu0 %v748
        %881 = vmatprep.subr.bf16.mxu0 0
        %882 = vmatpush1.bf16.msra.mxu0 %v747
        %883 = vmatprep.subr.bf16.mxu0 0
        %884 = vmatpush1.bf16.msra.mxu0 %v746
        %885 = vmatprep.subr.bf16.mxu0 0
        %886 = vmatpush1.bf16.msra.mxu0 %v745
        %887 = vmatprep.subr.bf16.mxu0 0
        %888 = vmatpush1.bf16.msra.mxu0 %v744
        %889 = vmatprep.subr.bf16.mxu0 0
        %890 = vmatpush2.bf16.msra.mxu0 %v759
        %891 = vmatprep.subr.bf16.mxu0 0
        %892 = vmatpush2.bf16.msra.mxu0 %v758
        %893 = vmatprep.subr.bf16.mxu0 0
        %894 = vmatpush2.bf16.msra.mxu0 %v757
        %895 = vmatprep.subr.bf16.mxu0 0
        %896 = vmatpush2.bf16.msra.mxu0 %v756
        %897 = vmatprep.subr.bf16.mxu0 0
        %898 = vmatpush2.bf16.msra.mxu0 %v755
        %899 = vmatprep.subr.bf16.mxu0 0
        %900 = vmatpush2.bf16.msra.mxu0 %v754
        %901 = vmatprep.subr.bf16.mxu0 0
        %902 = vmatpush2.bf16.msra.mxu0 %v753
        %903 = vmatprep.subr.bf16.mxu0 0
        %904 = vmatpush2.bf16.msra.mxu0 %v752
        %905 = vmatprep.mubr.bf16.mxu0 %v515
        %906 = vmatmul.mubr.bf16.gmra.mxu0 %v514
        %v907 = vpop.f32.mrf.mxu0
        %v908 = vadd.f32 %v859, %v907
        %v909 = vpop.f32.mrf.mxu0
        %v910 = vpop.f32.mrf.mxu0
        %v911 = vadd.f32 %v862, %v910
        %v912 = vpop.f32.mrf.mxu0
        %913 = vmatprep.mubr.bf16.mxu0 %v521
        %914 = vmatmul.mubr.bf16.gmra.mxu0 %v520
        %v915 = vpop.f32.mrf.mxu0
        %v916 = vadd.f32 %v867, %v915
        %v917 = vpop.f32.mrf.mxu0
        %v918 = vpop.f32.mrf.mxu0
        %v919 = vadd.f32 %v870, %v918
        %v920 = vpop.f32.mrf.mxu0
        %921 = vdwg.mxu0
        %922 = vmatprep.subr.bf16.mxu0 0
        %923 = vmatpush1.bf16.msra.mxu0 %v767
        %924 = vmatprep.subr.bf16.mxu0 0
        %925 = vmatpush1.bf16.msra.mxu0 %v766
        %926 = vmatprep.subr.bf16.mxu0 0
        %927 = vmatpush1.bf16.msra.mxu0 %v765
        %928 = vmatprep.subr.bf16.mxu0 0
        %929 = vmatpush1.bf16.msra.mxu0 %v764
        %930 = vmatprep.subr.bf16.mxu0 0
        %931 = vmatpush1.bf16.msra.mxu0 %v763
        %932 = vmatprep.subr.bf16.mxu0 0
        %933 = vmatpush1.bf16.msra.mxu0 %v762
        %934 = vmatprep.subr.bf16.mxu0 0
        %935 = vmatpush1.bf16.msra.mxu0 %v761
        %936 = vmatprep.subr.bf16.mxu0 0
        %937 = vmatpush1.bf16.msra.mxu0 %v760
        %938 = vmatprep.subr.bf16.mxu0 0
        %939 = vmatpush2.bf16.msra.mxu0 %v775
        %940 = vmatprep.subr.bf16.mxu0 0
        %941 = vmatpush2.bf16.msra.mxu0 %v774
        %942 = vmatprep.subr.bf16.mxu0 0
        %943 = vmatpush2.bf16.msra.mxu0 %v773
        %944 = vmatprep.subr.bf16.mxu0 0
        %945 = vmatpush2.bf16.msra.mxu0 %v772
        %946 = vmatprep.subr.bf16.mxu0 0
        %947 = vmatpush2.bf16.msra.mxu0 %v771
        %948 = vmatprep.subr.bf16.mxu0 0
        %949 = vmatpush2.bf16.msra.mxu0 %v770
        %950 = vmatprep.subr.bf16.mxu0 0
        %951 = vmatpush2.bf16.msra.mxu0 %v769
        %952 = vmatprep.subr.bf16.mxu0 0
        %953 = vmatpush2.bf16.msra.mxu0 %v768
        %954 = vmatprep.mubr.bf16.mxu0 %v517
        %955 = vmatmul.mubr.bf16.gmra.mxu0 %v516
        %v956 = vpop.f32.mrf.mxu0
        %v957 = vadd.f32 %v908, %v956
        %v958 = vpop.f32.mrf.mxu0
        %v959 = vpop.f32.mrf.mxu0
        %v960 = vadd.f32 %v911, %v959
        %v961 = vpop.f32.mrf.mxu0
        %962 = vmatprep.mubr.bf16.mxu0 %v523
        %963 = vmatmul.mubr.bf16.gmra.mxu0 %v522
        %v964 = vpop.f32.mrf.mxu0
        %v965 = vadd.f32 %v916, %v964
        %v966 = vpop.f32.mrf.mxu0
        %v967 = vpop.f32.mrf.mxu0
        %v968 = vadd.f32 %v919, %v967
        %v969 = vpop.f32.mrf.mxu0
        %970 = vdwg.mxu0
        %v979 = vunpack.c.l.b16 %v296
        %v980 = vunpack.c.h.b16 %v296
        %v981 = vunpack.c.l.b16 %v297
        %v982 = vunpack.c.h.b16 %v297
        %v983 = vunpack.c.l.b16 %v298
        %v984 = vunpack.c.h.b16 %v298
        %v985 = vunpack.c.l.b16 %v299
        %v986 = vunpack.c.h.b16 %v299
        %v987 = vunpack.c.l.b16 %v300
        %v988 = vunpack.c.h.b16 %v300
        %v989 = vunpack.c.l.b16 %v301
        %v990 = vunpack.c.h.b16 %v301
        %v991 = vunpack.c.l.b16 %v302
        %v992 = vunpack.c.h.b16 %v302
        %v993 = vunpack.c.l.b16 %v303
        %v994 = vunpack.c.h.b16 %v303
        %v995 = vpack.c.b16 %v983, %v979
        %v996 = vpack.c.b16 %v984, %v980
        %v997 = vpack.c.b16 %v985, %v981
        %v998 = vpack.c.b16 %v986, %v982
        %v999 = vpack.c.b16 %v991, %v987
        %v1000 = vpack.c.b16 %v992, %v988
        %v1001 = vpack.c.b16 %v993, %v989
        %v1002 = vpack.c.b16 %v994, %v990
        %v1075 = vunpack.c.l.b16 %v304
        %v1076 = vunpack.c.l.b16 %v305
        %v1077 = vunpack.c.l.b16 %v306
        %v1078 = vunpack.c.l.b16 %v307
        %v1079 = vunpack.c.l.b16 %v308
        %v1080 = vunpack.c.l.b16 %v309
        %v1081 = vunpack.c.l.b16 %v310
        %v1082 = vunpack.c.l.b16 %v311
        %v1083 = vunpack.c.l.b16 %v312
        %v1084 = vunpack.c.l.b16 %v313
        %v1085 = vunpack.c.l.b16 %v314
        %v1086 = vunpack.c.l.b16 %v315
        %v1087 = vunpack.c.l.b16 %v316
        %v1088 = vunpack.c.l.b16 %v317
        %v1089 = vunpack.c.l.b16 %v318
        %v1090 = vunpack.c.l.b16 %v319
        %v1091 = vunpack.c.l.b16 %v320
        %v1092 = vunpack.c.l.b16 %v321
        %v1093 = vunpack.c.l.b16 %v322
        %v1094 = vunpack.c.l.b16 %v323
        %v1095 = vunpack.c.l.b16 %v324
        %v1096 = vunpack.c.l.b16 %v325
        %v1097 = vunpack.c.l.b16 %v326
        %v1098 = vunpack.c.l.b16 %v327
        %v1099 = vunpack.c.l.b16 %v328
        %v1100 = vunpack.c.l.b16 %v329
        %v1101 = vunpack.c.l.b16 %v330
        %v1102 = vunpack.c.l.b16 %v331
        %v1103 = vunpack.c.l.b16 %v332
        %v1104 = vunpack.c.l.b16 %v333
        %v1105 = vunpack.c.l.b16 %v334
        %v1106 = vunpack.c.l.b16 %v335
        %v1107 = vunpack.c.l.b16 %v336
        %v1108 = vunpack.c.l.b16 %v337
        %v1109 = vunpack.c.l.b16 %v338
        %v1110 = vunpack.c.l.b16 %v339
        %v1111 = vunpack.c.l.b16 %v340
        %v1112 = vunpack.c.l.b16 %v341
        %v1113 = vunpack.c.l.b16 %v342
        %v1114 = vunpack.c.l.b16 %v343
        %v1115 = vunpack.c.l.b16 %v344
        %v1116 = vunpack.c.l.b16 %v345
        %v1117 = vunpack.c.l.b16 %v346
        %v1118 = vunpack.c.l.b16 %v347
        %v1119 = vunpack.c.l.b16 %v348
        %v1120 = vunpack.c.l.b16 %v349
        %v1121 = vunpack.c.l.b16 %v350
        %v1122 = vunpack.c.l.b16 %v351
        %v1123 = vunpack.c.l.b16 %v352
        %v1124 = vunpack.c.l.b16 %v353
        %v1125 = vunpack.c.l.b16 %v354
        %v1126 = vunpack.c.l.b16 %v355
        %v1127 = vunpack.c.l.b16 %v356
        %v1128 = vunpack.c.l.b16 %v357
        %v1129 = vunpack.c.l.b16 %v358
        %v1130 = vunpack.c.l.b16 %v359
        %v1131 = vunpack.c.l.b16 %v360
        %v1132 = vunpack.c.l.b16 %v361
        %v1133 = vunpack.c.l.b16 %v362
        %v1134 = vunpack.c.l.b16 %v363
        %v1135 = vunpack.c.l.b16 %v364
        %v1136 = vunpack.c.l.b16 %v365
        %v1137 = vunpack.c.l.b16 %v366
        %v1138 = vunpack.c.l.b16 %v367
        %v1139 = vpack.c.b16 %v1076, %v1075
        %v1140 = vpack.c.b16 %v1078, %v1077
        %v1141 = vpack.c.b16 %v1080, %v1079
        %v1142 = vpack.c.b16 %v1082, %v1081
        %v1143 = vpack.c.b16 %v1084, %v1083
        %v1144 = vpack.c.b16 %v1086, %v1085
        %v1145 = vpack.c.b16 %v1088, %v1087
        %v1146 = vpack.c.b16 %v1090, %v1089
        %v1147 = vpack.c.b16 %v1092, %v1091
        %v1148 = vpack.c.b16 %v1094, %v1093
        %v1149 = vpack.c.b16 %v1096, %v1095
        %v1150 = vpack.c.b16 %v1098, %v1097
        %v1151 = vpack.c.b16 %v1100, %v1099
        %v1152 = vpack.c.b16 %v1102, %v1101
        %v1153 = vpack.c.b16 %v1104, %v1103
        %v1154 = vpack.c.b16 %v1106, %v1105
        %v1155 = vpack.c.b16 %v1108, %v1107
        %v1156 = vpack.c.b16 %v1110, %v1109
        %v1157 = vpack.c.b16 %v1112, %v1111
        %v1158 = vpack.c.b16 %v1114, %v1113
        %v1159 = vpack.c.b16 %v1116, %v1115
        %v1160 = vpack.c.b16 %v1118, %v1117
        %v1161 = vpack.c.b16 %v1120, %v1119
        %v1162 = vpack.c.b16 %v1122, %v1121
        %v1163 = vpack.c.b16 %v1124, %v1123
        %v1164 = vpack.c.b16 %v1126, %v1125
        %v1165 = vpack.c.b16 %v1128, %v1127
        %v1166 = vpack.c.b16 %v1130, %v1129
        %v1167 = vpack.c.b16 %v1132, %v1131
        %v1168 = vpack.c.b16 %v1134, %v1133
        %v1169 = vpack.c.b16 %v1136, %v1135
        %v1170 = vpack.c.b16 %v1138, %v1137
        %1203 = vmatprep.subr.bf16.mxu0 0
        %1204 = vmatpush1.bf16.msra.mxu0 %v1146
        %1205 = vmatprep.subr.bf16.mxu0 0
        %1206 = vmatpush1.bf16.msra.mxu0 %v1145
        %1207 = vmatprep.subr.bf16.mxu0 0
        %1208 = vmatpush1.bf16.msra.mxu0 %v1144
        %1209 = vmatprep.subr.bf16.mxu0 0
        %1210 = vmatpush1.bf16.msra.mxu0 %v1143
        %1211 = vmatprep.subr.bf16.mxu0 0
        %1212 = vmatpush1.bf16.msra.mxu0 %v1142
        %1213 = vmatprep.subr.bf16.mxu0 0
        %1214 = vmatpush1.bf16.msra.mxu0 %v1141
        %1215 = vmatprep.subr.bf16.mxu0 0
        %1216 = vmatpush1.bf16.msra.mxu0 %v1140
        %1217 = vmatprep.subr.bf16.mxu0 0
        %1218 = vmatpush1.bf16.msra.mxu0 %v1139
        %1219 = vmatprep.subr.bf16.mxu0 0
        %1220 = vmatpush2.bf16.msra.mxu0 %v1154
        %1221 = vmatprep.subr.bf16.mxu0 0
        %1222 = vmatpush2.bf16.msra.mxu0 %v1153
        %1223 = vmatprep.subr.bf16.mxu0 0
        %1224 = vmatpush2.bf16.msra.mxu0 %v1152
        %1225 = vmatprep.subr.bf16.mxu0 0
        %1226 = vmatpush2.bf16.msra.mxu0 %v1151
        %1227 = vmatprep.subr.bf16.mxu0 0
        %1228 = vmatpush2.bf16.msra.mxu0 %v1150
        %1229 = vmatprep.subr.bf16.mxu0 0
        %1230 = vmatpush2.bf16.msra.mxu0 %v1149
        %1231 = vmatprep.subr.bf16.mxu0 0
        %1232 = vmatpush2.bf16.msra.mxu0 %v1148
        %1233 = vmatprep.subr.bf16.mxu0 0
        %1234 = vmatpush2.bf16.msra.mxu0 %v1147
        %1235 = vmatprep.mubr.bf16.mxu0 %v996
        %1236 = vmatmul.mubr.bf16.gmra.mxu0 %v995
        %v1237 = vpop.f32.mrf.mxu0
        %v1238 = vadd.f32 %v957, %v1237
        %v1239 = vpop.f32.mrf.mxu0
        %v1240 = vpop.f32.mrf.mxu0
        %v1241 = vadd.f32 %v960, %v1240
        %v1242 = vpop.f32.mrf.mxu0
        %1243 = vmatprep.mubr.bf16.mxu0 %v1000
        %1244 = vmatmul.mubr.bf16.gmra.mxu0 %v999
        %v1245 = vpop.f32.mrf.mxu0
        %v1246 = vadd.f32 %v965, %v1245
        %v1247 = vpop.f32.mrf.mxu0
        %v1248 = vpop.f32.mrf.mxu0
        %v1249 = vadd.f32 %v968, %v1248
        %v1250 = vpop.f32.mrf.mxu0
        %1251 = vdwg.mxu0
        %1252 = vmatprep.subr.bf16.mxu0 0
        %1253 = vmatpush1.bf16.msra.mxu0 %v1162
        %1254 = vmatprep.subr.bf16.mxu0 0
        %1255 = vmatpush1.bf16.msra.mxu0 %v1161
        %1256 = vmatprep.subr.bf16.mxu0 0
        %1257 = vmatpush1.bf16.msra.mxu0 %v1160
        %1258 = vmatprep.subr.bf16.mxu0 0
        %1259 = vmatpush1.bf16.msra.mxu0 %v1159
        %1260 = vmatprep.subr.bf16.mxu0 0
        %1261 = vmatpush1.bf16.msra.mxu0 %v1158
        %1262 = vmatprep.subr.bf16.mxu0 0
        %1263 = vmatpush1.bf16.msra.mxu0 %v1157
        %1264 = vmatprep.subr.bf16.mxu0 0
        %1265 = vmatpush1.bf16.msra.mxu0 %v1156
        %1266 = vmatprep.subr.bf16.mxu0 0
        %1267 = vmatpush1.bf16.msra.mxu0 %v1155
        %1268 = vmatprep.subr.bf16.mxu0 0
        %1269 = vmatpush2.bf16.msra.mxu0 %v1170
        %1270 = vmatprep.subr.bf16.mxu0 0
        %1271 = vmatpush2.bf16.msra.mxu0 %v1169
        %1272 = vmatprep.subr.bf16.mxu0 0
        %1273 = vmatpush2.bf16.msra.mxu0 %v1168
        %1274 = vmatprep.subr.bf16.mxu0 0
        %1275 = vmatpush2.bf16.msra.mxu0 %v1167
        %1276 = vmatprep.subr.bf16.mxu0 0
        %1277 = vmatpush2.bf16.msra.mxu0 %v1166
        %1278 = vmatprep.subr.bf16.mxu0 0
        %1279 = vmatpush2.bf16.msra.mxu0 %v1165
        %1280 = vmatprep.subr.bf16.mxu0 0
        %1281 = vmatpush2.bf16.msra.mxu0 %v1164
        %1282 = vmatprep.subr.bf16.mxu0 0
        %1283 = vmatpush2.bf16.msra.mxu0 %v1163
        %1284 = vmatprep.mubr.bf16.mxu0 %v998
        %1285 = vmatmul.mubr.bf16.gmra.mxu0 %v997
        %v1286 = vpop.f32.mrf.mxu0
        %v1287 = vadd.f32 %v1238, %v1286
        %v1288 = vpop.f32.mrf.mxu0
        %v1289 = vpop.f32.mrf.mxu0
        %v1290 = vadd.f32 %v1241, %v1289
        %v1291 = vpop.f32.mrf.mxu0
        %1292 = vmatprep.mubr.bf16.mxu0 %v1002
        %1293 = vmatmul.mubr.bf16.gmra.mxu0 %v1001
        %v1294 = vpop.f32.mrf.mxu0
        %v1295 = vadd.f32 %v1246, %v1294
        %v1296 = vpop.f32.mrf.mxu0
        %v1297 = vpop.f32.mrf.mxu0
        %v1298 = vadd.f32 %v1249, %v1297
        %v1299 = vpop.f32.mrf.mxu0
        %1300 = vdwg.mxu0
        %v1301 = vld [vmem:[%s4] sm:$0x1]
        %v1303 = vlaneseq
        %v1304 = vshrl.u32 %v1303, 7
        %v1305 = vsub.s32 0, %v1304
        %v1306 = vrot.slane %v1301, %v1305
        %v1308 = vadd.f32 %v1287, %v1306
        %v1309 = vadd.f32 %v1290, %v1306
        %v1310 = vadd.f32 %v1295, %v1306
        %v1311 = vadd.f32 %v1298, %v1306
        %v1312 = vpack.c.bf16 %v1309, %v1308
        %v1313 = vpack.c.bf16 %v1311, %v1310
        %v1316 = vunpack.c.l.b16 %v1312
        %v1317 = vunpack.c.h.b16 %v1312
        %v1318 = vunpack.c.l.b16 %v1313
        %v1319 = vunpack.c.h.b16 %v1313
        %v1320 = vpack.c.b16 %v1316, %v1316
        %v1321 = vpack.c.b16 %v1317, %v1317
        %v1322 = vpack.c.b16 %v1318, %v1318
        %v1323 = vpack.c.b16 %v1319, %v1319
        %1328 = vst [vmem:[%s293] sm:$0xf] %v1320
        %1329 = vst [vmem:[%s293 + $0x4] sm:$0xf] %v1321
        %1330 = vst [vmem:[%s293 + $0x8] sm:$0xf] %v1322
        %1331 = vst [vmem:[%s293 + $0xc] sm:$0xf] %v1323
        %s1332 = smul.u32 4, %s16
        %p1333 = scmp.lt.s32.totalorder %s1332, 15
        %s1334 = scalar_select %p1333, %s1332, 15
        %s1335 = smul.addr %s1334, 4
        %s1336 = scalar_lea.vmem %s5, %s1335
        // Predicated region
        $region64: #{multimodal_forward.1} parent=58 // pred_check
          %p1337 = pneg %p149
        $region65: #{multimodal_forward.1} parent=58 // pred_check_branch
          %1339 = sbr.rel (%p1337) target = $region67
        $region66: #{multimodal_forward.1} parent=58 // pred_region
          %s1340 = smul.u32 4, %s16
        $region67: #{multimodal_forward.1} parent=58 // pred_fallthru
          _
      $region59: #{multimodal_forward.1} parent=5 // pred_fallthru
        _
      %p1341 = scmp.le.s32.totalorder 2, %s11
      // Predicated region
      $region68: #{multimodal_forward.1} parent=5 // pred_check
        %p1342 = pneg %p1341
      $region69: #{multimodal_forward.1} parent=5 // pred_check_branch
        %1344 = sbr.rel (%p1342) target = $region71
      $region70: #{multimodal_forward.1} parent=5 // pred_region
        %s1345 = ssub.s32 %s11, 2
        // Predicated region
        $region72: #{multimodal_forward.1} parent=70 // pred_check
          %p1346 = pneg %p155
        $region73: #{multimodal_forward.1} parent=70 // pred_check_branch
          %1348 = sbr.rel (%p1346) target = $region75
        $region74: #{multimodal_forward.1} parent=70 // pred_region
          %s1349 = smul.u32 4, %s17
          %p1350 = scmp.lt.s32.totalorder %s1349, 15
          %s1351 = scalar_select %p1350, %s1349, 15
          %s1352 = smul.addr %s1351, 4
          %s1353 = scalar_lea.vmem %s5, %s1352
        $region75: #{multimodal_forward.1} parent=70 // pred_fallthru
          _
      $region71: #{multimodal_forward.1} parent=5 // pred_fallthru
        _
    $region6: #{multimodal_forward.1} parent=1 // loop_footer
      %s15 = sadd.s32 1, %s11
    $region7: #{multimodal_forward.1} parent=1 // loop_footer_branch
      %10 = sbr.rel target = $region3
    $region8: #{multimodal_forward.1} parent=1 // loop_exit
      _

</llo_original>
